<compile_context>
chip_gen: v5e
topology: v5e:2x2
jax: 0.10.0
libtpu: 0.0.40
codegen_flags: <defaults>
</compile_context>

<pallas_src>
import functools

import jax
import jax.numpy as jnp
from jax.experimental import pallas as pl
from jax.experimental.pallas import tpu as pltpu

D_LOW, D_HIGH, K, H_ENC, H_DEC = 50, 200, 10, 20, 10

# ---- packed weight-slab layouts (8-aligned row offsets) ----
# ENC slab, cols = 20: [enc_hr_w | enc_lr_w | sh_w1 | sh_w2 | bias rows | pad]
_R_EHW, _R_ELW, _R_S1W, _R_S2W = 0, 200, 256, 280
_R_EHB, _R_ELB, _R_S1B, _R_S2B = 304, 305, 306, 307
_ENC_ROWS = 312
# PHI head slab, cols = 128: fused (mu|lv) encoder head, real cols [0:2K), rest zero
_PHI_COLS = 128
_R_PW, _R_PB = 0, 24
_PHI_ROWS = 32
# DEC trunk slab, cols = 10: [di_w1 | di_w2 | bias rows | pad]
_R_D1W, _R_D2W, _R_D1B, _R_D2B = 0, 16, 32, 33
_DEC_ROWS = 40
# decoder-head slabs (one per resolution), zero-padded to lane-aligned widths
_LOW_COLS = 128    # mu in cols [0:50), lv in [50:100), zero pad after
_HIGH_COLS = 512   # mu in cols [0:200), lv in [200:400), zero pad after
_R_HW, _R_HB = 0, 16
_HEAD_ROWS = 24

# packed output layout — every segment starts on a 128-lane boundary
_O_TL, _O_PL, _O_TH, _O_PH = 0, 128, 256, 768
_OUT_COLS = 896


def multiz_kernel(x_hr_ref, x_lr_ref, eps_hr_ref, eps_lr_ref,
                  enc_ref, phi_ref, dec_ref, low_ref, high_ref, out_ref,
                  *, compute_dtype):
    bm = x_lr_ref.shape[0]

    def dot(a, w):
        # Optionally cast operands to bf16 at the MXU boundary; always
        # accumulate in f32. Elementwise math stays f32.
        return jnp.dot(a.astype(compute_dtype), w.astype(compute_dtype),
                       preferred_element_type=jnp.float32)

    # ---- per-resolution first layers: Linear(D, 20) + ReLU ----
    h_lr = jnp.maximum(
        dot(x_lr_ref[...], enc_ref[_R_ELW:_R_ELW + D_LOW, :])
        + enc_ref[_R_ELB:_R_ELB + 1, :], 0.0)
    h_hr = jnp.maximum(
        dot(x_hr_ref[...], enc_ref[_R_EHW:_R_EHW + D_HIGH, :])
        + enc_ref[_R_EHB:_R_EHB + 1, :], 0.0)

    # ---- shared encoder trunk on the stacked batch (rows [0:bm]=low, [bm:2bm]=high) ----
    h = jnp.concatenate([h_lr, h_hr], axis=0)                              # [2bm, 20]
    h = jnp.maximum(dot(h, enc_ref[_R_S1W:_R_S1W + H_ENC, :])
                    + enc_ref[_R_S1B:_R_S1B + 1, :], 0.0)
    h = jnp.maximum(dot(h, enc_ref[_R_S2W:_R_S2W + H_ENC, :])
                    + enc_ref[_R_S2B:_R_S2B + 1, :], 0.0)

    # ---- fused mu|logvar head: one matmul -> [2bm, 128] (cols >= 2K are exactly 0) ----
    mulv = dot(h, phi_ref[_R_PW:_R_PW + H_ENC, :]) + phi_ref[_R_PB:_R_PB + 1, :]
    mu, lv = mulv[:, :K], mulv[:, K:2 * K]

    # ---- reparameterize (eps stacked in the same low/high row order), f32 ----
    eps = jnp.concatenate([eps_lr_ref[...], eps_hr_ref[...]], axis=0)      # [2bm, K]
    z = eps * jnp.exp(0.5 * lv) + mu

    # ---- shared decoder trunk: Linear(K,10)+ReLU, Linear(10,10)+ReLU ----
    hd = jnp.maximum(dot(z, dec_ref[_R_D1W:_R_D1W + K, :])
                     + dec_ref[_R_D1B:_R_D1B + 1, :], 0.0)
    hd = jnp.maximum(dot(hd, dec_ref[_R_D2W:_R_D2W + H_DEC, :])
                     + dec_ref[_R_D2B:_R_D2B + 1, :], 0.0)

    # ---- per-resolution fused decoder heads, already 128-lane padded ----
    theta_low = (dot(hd[:bm], low_ref[_R_HW:_R_HW + H_DEC, :])
                 + low_ref[_R_HB:_R_HB + 1, :])                            # [bm, 128]
    theta_high = (dot(hd[bm:], high_ref[_R_HW:_R_HW + H_DEC, :])
                  + high_ref[_R_HB:_R_HB + 1, :])                          # [bm, 512]

    # ---- direct 128-lane-aligned full-width stores (no concat, no masked vst) ----
    out_ref[:, _O_TL:_O_TL + _LOW_COLS] = theta_low
    out_ref[:, _O_PL:_O_PL + _PHI_COLS] = mulv[:bm]
    out_ref[:, _O_TH:_O_TH + _HIGH_COLS] = theta_high
    out_ref[:, _O_PH:_O_PH + _PHI_COLS] = mulv[bm:]


def init_params(key):
    """PyTorch-style uniform(-1/sqrt(fan_in), 1/sqrt(fan_in)) init, deterministic.
    Weights stored [in, out] so y = x @ W + b; biases [1, out]."""
    def linear(k, fan_in, fan_out):
        kw, kb = jax.random.split(k)
        bound = 1.0 / float(fan_in) ** 0.5
        w = jax.random.uniform(kw, (fan_in, fan_out), jnp.float32, -bound, bound)
        b = jax.random.uniform(kb, (1, fan_out), jnp.float32, -bound, bound)
        return w, b

    ks = jax.random.split(key, 12)
    enc_hr = linear(ks[0], D_HIGH, H_ENC)
    enc_lr = linear(ks[1], D_LOW, H_ENC)
    sh1 = linear(ks[2], H_ENC, H_ENC)
    sh2 = linear(ks[3], H_ENC, H_ENC)
    mu = linear(ks[4], H_ENC, K)
    lv = linear(ks[5], H_ENC, K)
    di1 = linear(ks[6], K, H_DEC)
    di2 = linear(ks[7], H_DEC, H_DEC)
    dhr_mu = linear(ks[8], H_DEC, D_HIGH)
    dhr_lv = linear(ks[9], H_DEC, D_HIGH)
    dlr_mu = linear(ks[10], H_DEC, D_LOW)
    dlr_lv = linear(ks[11], H_DEC, D_LOW)
    return (enc_hr + enc_lr + sh1 + sh2 + mu + lv + di1 + di2
            + dhr_mu + dhr_lv + dlr_mu + dlr_lv)


def _pad(a, rows, cols=None):
    cols = a.shape[1] if cols is None else cols
    return jnp.pad(a, ((0, rows - a.shape[0]), (0, cols - a.shape[1])))


def pack_params(params):
    """Pack the 24 weight/bias tensors into 5 lane-dense f32 slabs (done once)."""
    (ehw, ehb, elw, elb, s1w, s1b, s2w, s2b, mw, mb, lw, lb,
     d1w, d1b, d2w, d2b, hmw, hmb, hlw, hlb, lmw, lmb, llw, llb) = params
    f32 = jnp.float32

    enc = jnp.concatenate([
        _pad(ehw, 200), _pad(elw, 56), _pad(s1w, 24), _pad(s2w, 24),
        ehb, elb, s1b, s2b,
        jnp.zeros((_ENC_ROWS - 308, H_ENC), f32),
    ], axis=0)                                                   # [312, 20]

    phi_w = jnp.concatenate([mw, lw], axis=1)                    # [20, 2K]
    phi_b = jnp.concatenate([mb, lb], axis=1)                    # [1, 2K]
    phi = jnp.concatenate([
        _pad(phi_w, 24, _PHI_COLS), _pad(phi_b, 1, _PHI_COLS),
        jnp.zeros((_PHI_ROWS - 25, _PHI_COLS), f32),
    ], axis=0)                                                   # [32, 128]

    dec = jnp.concatenate([
        _pad(d1w, 16), _pad(d2w, 16), d1b, d2b,
        jnp.zeros((_DEC_ROWS - 34, H_DEC), f32),
    ], axis=0)                                                   # [40, 10]

    low_w = jnp.concatenate([lmw, llw], axis=1)                  # [10, 100]
    low_b = jnp.concatenate([lmb, llb], axis=1)
    low = jnp.concatenate([
        _pad(low_w, 16, _LOW_COLS), _pad(low_b, 1, _LOW_COLS),
        jnp.zeros((_HEAD_ROWS - 17, _LOW_COLS), f32),
    ], axis=0)                                                   # [24, 128]

    high_w = jnp.concatenate([hmw, hlw], axis=1)                 # [10, 400]
    high_b = jnp.concatenate([hmb, hlb], axis=1)
    high = jnp.concatenate([
        _pad(high_w, 16, _HIGH_COLS), _pad(high_b, 1, _HIGH_COLS),
        jnp.zeros((_HEAD_ROWS - 17, _HIGH_COLS), f32),
    ], axis=0)                                                   # [24, 512]

    return enc, phi, dec, low, high


def _round_up(x, m):
    return (x + m - 1) // m * m


def multiz_forward(x_hr, x_lr, eps_hr, eps_lr, packed, *,
                   batch_block=2048, use_bf16=False):
    enc_slab, phi_slab, dec_slab, low_slab, high_slab = packed
    B = x_hr.shape[0]
    f32 = jnp.float32

    # Pad the batch to a sublane multiple so the row-bm splits of the stacked
    # [2*bm, .] tensors stay 8-aligned (no Mosaic relayout copies) and every
    # block shape is legal. Extra rows are sliced off after the call.
    B_pad = _round_up(max(B, 1), 8)
    if B_pad != B:
        pad = ((0, B_pad - B), (0, 0))
        x_hr = jnp.pad(x_hr, pad)
        x_lr = jnp.pad(x_lr, pad)
        eps_hr = jnp.pad(eps_hr, pad)
        eps_lr = jnp.pad(eps_lr, pad)

    # Block size: multiple of 8, capped by batch_block (keep <= 2048 on v7x at
    # the 48 MiB scoped-VMEM limit below), and chosen so the grid has >= 2
    # steps when the batch allows it, so v7x's two TensorCores both get work.
    assert batch_block % 8 == 0 and batch_block > 0
    bm = min(batch_block, _round_up(pl.cdiv(B_pad, 2), 8))
    grid = (pl.cdiv(B_pad, bm),)

    compute_dtype = jnp.bfloat16 if use_bf16 else jnp.float32
    kernel = functools.partial(multiz_kernel, compute_dtype=compute_dtype)

    macs_per_row = (D_LOW * H_ENC + D_HIGH * H_ENC            # first layers
                    + 2 * 2 * H_ENC * H_ENC                   # shared trunk (2 paths)
                    + 2 * H_ENC * 2 * K                       # mu|lv head (2 paths)
                    + 2 * (K * H_DEC + H_DEC * H_DEC)         # decoder trunk (2 paths)
                    + H_DEC * 2 * D_LOW + H_DEC * 2 * D_HIGH)  # decoder heads
    slab_bytes = sum(int(s.size) * s.dtype.itemsize
                     for s in (enc_slab, phi_slab, dec_slab, low_slab, high_slab))
    cost = pl.CostEstimate(
        flops=2 * B_pad * macs_per_row,
        transcendentals=2 * K * B_pad,
        bytes_accessed=4 * B_pad * (D_HIGH + D_LOW + 2 * K + _OUT_COLS) + slab_bytes)

    vmem_full = pl.BlockSpec(memory_space=pltpu.MemorySpace.VMEM)
    out = pl.pallas_call(
        kernel,
        out_shape=jax.ShapeDtypeStruct((B_pad, _OUT_COLS), f32),
        grid=grid,
        in_specs=[
            pl.BlockSpec((bm, D_HIGH), lambda i: (i, 0)),
            pl.BlockSpec((bm, D_LOW), lambda i: (i, 0)),
            pl.BlockSpec((bm, K), lambda i: (i, 0)),
            pl.BlockSpec((bm, K), lambda i: (i, 0)),
            vmem_full, vmem_full, vmem_full, vmem_full, vmem_full,
        ],
        out_specs=pl.BlockSpec((bm, _OUT_COLS), lambda i: (i, 0)),
        compiler_params=pltpu.CompilerParams(
            dimension_semantics=("parallel",),
            vmem_limit_bytes=48 * 1024 * 1024),   # 25% headroom on v7x's 64 MiB
        cost_estimate=cost,
    )(x_hr, x_lr, eps_hr, eps_lr, enc_slab, phi_slab, dec_slab, low_slab, high_slab)

    out = out[:B]
    theta_low_z = (out[:, _O_TL:_O_TL + D_LOW],
                   out[:, _O_TL + D_LOW:_O_TL + 2 * D_LOW])
    phi_low_x = (out[:, _O_PL:_O_PL + K], out[:, _O_PL + K:_O_PL + 2 * K])
    theta_high_z = (out[:, _O_TH:_O_TH + D_HIGH],
                    out[:, _O_TH + D_HIGH:_O_TH + 2 * D_HIGH])
    phi_high_x = (out[:, _O_PH:_O_PH + K], out[:, _O_PH + K:_O_PH + 2 * K])
    return theta_low_z, phi_low_x, theta_high_z, phi_high_x


# ---- pure-JAX reference for correctness check ----
def _ref_forward(x_hr, x_lr, eps_hr, eps_lr, params):
    (ehw, ehb, elw, elb, s1w, s1b, s2w, s2b, mw, mb, lw, lb,
     d1w, d1b, d2w, d2b, hmw, hmb, hlw, hlb, lmw, lmb, llw, llb) = params

    def encode(x, fw, fb):
        h = jnp.maximum(x @ fw + fb, 0.0)
        h = jnp.maximum(h @ s1w + s1b, 0.0)
        h = jnp.maximum(h @ s2w + s2b, 0.0)
        return h @ mw + mb, h @ lw + lb

    def decode(z, dmw, dmb, dlw, dlb):
        h = jnp.maximum(z @ d1w + d1b, 0.0)
        h = jnp.maximum(h @ d2w + d2b, 0.0)
        return h @ dmw + dmb, h @ dlw + dlb

    mu_l, lv_l = encode(x_lr, elw, elb)
    z_l = eps_lr * jnp.exp(0.5 * lv_l) + mu_l
    t_l = decode(z_l, lmw, lmb, llw, llb)
    mu_h, lv_h = encode(x_hr, ehw, ehb)
    z_h = eps_hr * jnp.exp(0.5 * lv_h) + mu_h
    t_h = decode(z_h, hmw, hmb, hlw, hlb)
    return t_l, (mu_l, lv_l), t_h, (mu_h, lv_h)


if __name__ == "__main__":
    key = jax.random.PRNGKey(0)
    k_params, k_xhr, k_xlr, k_ehr, k_elr = jax.random.split(key, 5)

    params = init_params(k_params)
    packed = pack_params(params)

    def make_inputs(B):
        x_hr = jax.random.normal(k_xhr, (B, D_HIGH), jnp.float32)
        x_lr = jax.random.normal(k_xlr, (B, D_LOW), jnp.float32)
        eps_hr = jax.random.normal(k_ehr, (B, K), jnp.float32)
        eps_lr = jax.random.normal(k_elr, (B, K), jnp.float32)
        return x_hr, x_lr, eps_hr, eps_lr

    def check(out, ref, atol, rtol):
        flat_out = jax.tree_util.tree_leaves(out)
        flat_ref = jax.tree_util.tree_leaves(ref)
        assert len(flat_out) == len(flat_ref)
        for a, b in zip(flat_out, flat_ref):
            assert a.shape == b.shape, (a.shape, b.shape)
            assert bool(jnp.all(jnp.isfinite(a)))
            assert jnp.allclose(a, b, atol=atol, rtol=rtol), \
                float(jnp.max(jnp.abs(a - b)))

    # f32 path, batch an exact block multiple (B=8 -> single block).
    inp8 = make_inputs(8)
    out = jax.block_until_ready(multiz_forward(*inp8, packed))
    check(out, _ref_forward(*inp8, params), atol=1e-4, rtol=1e-4)

    # f32 path, batch not a multiple of the block (pads to 16, grid of 2).
    inp12 = make_inputs(12)
    out = jax.block_until_ready(multiz_forward(*inp12, packed))
    check(out, _ref_forward(*inp12, params), atol=1e-4, rtol=1e-4)

    # bf16-operand / f32-accumulate path (loose smoke-check tolerance).
    out = jax.block_until_ready(multiz_forward(*inp8, packed, use_bf16=True))
    check(out, _ref_forward(*inp8, params), atol=2e-1, rtol=2e-1)

    print("KERNEL_OK")
</pallas_src>

<mosaic_0001>
module attributes {stable_mosaic.version = 11 : i64} {
  func.func @multiz_kernel(%arg0: i32, %arg1: memref<8x200xf32, #tpu.memory_space<vmem>>, %arg2: memref<8x50xf32, #tpu.memory_space<vmem>>, %arg3: memref<8x10xf32, #tpu.memory_space<vmem>>, %arg4: memref<8x10xf32, #tpu.memory_space<vmem>>, %arg5: memref<312x20xf32, #tpu.memory_space<vmem>>, %arg6: memref<32x128xf32, #tpu.memory_space<vmem>>, %arg7: memref<40x10xf32, #tpu.memory_space<vmem>>, %arg8: memref<24x128xf32, #tpu.memory_space<vmem>>, %arg9: memref<24x512xf32, #tpu.memory_space<vmem>>, %arg10: memref<8x896xf32, #tpu.memory_space<vmem>>) attributes {dimension_semantics = [#tpu.dimension_semantics<parallel>], iteration_bounds = array<i64: 1>, scalar_prefetch = 0 : i64, scratch_operands = 0 : i64, tpu.core_type = #tpu.core_type<tc>, window_params = [{transform_indices = @transform_0, window_bounds = array<i64: 8, 200>}, {transform_indices = @transform_1, window_bounds = array<i64: 8, 50>}, {transform_indices = @transform_2, window_bounds = array<i64: 8, 10>}, {transform_indices = @transform_3, window_bounds = array<i64: 8, 10>}, {pipeline_mode = #tpu.pipeline_mode<synchronous>, transform_indices = @transform_4, window_bounds = array<i64: 312, 20>}, {pipeline_mode = #tpu.pipeline_mode<synchronous>, transform_indices = @transform_5, window_bounds = array<i64: 32, 128>}, {pipeline_mode = #tpu.pipeline_mode<synchronous>, transform_indices = @transform_6, window_bounds = array<i64: 40, 10>}, {pipeline_mode = #tpu.pipeline_mode<synchronous>, transform_indices = @transform_7, window_bounds = array<i64: 24, 128>}, {pipeline_mode = #tpu.pipeline_mode<synchronous>, transform_indices = @transform_8, window_bounds = array<i64: 24, 512>}, {transform_indices = @transform_9, window_bounds = array<i64: 8, 896>}]} {
    %c0 = arith.constant 0 : index
    %c0_0 = arith.constant 0 : index
    %0 = vector.load %arg2[%c0, %c0_0] : memref<8x50xf32, #tpu.memory_space<vmem>>, vector<8x50xf32>
    %c200 = arith.constant 200 : index
    %c0_1 = arith.constant 0 : index
    %1 = vector.load %arg5[%c200, %c0_1] : memref<312x20xf32, #tpu.memory_space<vmem>>, vector<50x20xf32>
    %cst = arith.constant dense<0.000000e+00> : vector<8x20xf32>
    %2 = tpu.matmul %0, %1, %cst {dimension_numbers = #tpu.dot_dimension_numbers<[1], [0], [0], [1], [0, 0, 1, 1], [], []>} : vector<8x50xf32>, vector<50x20xf32>, vector<8x20xf32> -> vector<8x20xf32>
    %c305 = arith.constant 305 : index
    %c0_2 = arith.constant 0 : index
    %3 = vector.load %arg5[%c305, %c0_2] : memref<312x20xf32, #tpu.memory_space<vmem>>, vector<1x20xf32>
    %4 = vector.broadcast %3 : vector<1x20xf32> to vector<8x20xf32>
    %5 = arith.addf %2, %4 : vector<8x20xf32>
    %cst_3 = arith.constant 0.000000e+00 : f32
    %6 = vector.broadcast %cst_3 : f32 to vector<8x20xf32>
    %7 = arith.maximumf %5, %6 : vector<8x20xf32>
    %c0_4 = arith.constant 0 : index
    %c0_5 = arith.constant 0 : index
    %8 = vector.load %arg1[%c0_4, %c0_5] : memref<8x200xf32, #tpu.memory_space<vmem>>, vector<8x200xf32>
    %c0_6 = arith.constant 0 : index
    %c0_7 = arith.constant 0 : index
    %9 = vector.load %arg5[%c0_6, %c0_7] : memref<312x20xf32, #tpu.memory_space<vmem>>, vector<200x20xf32>
    %cst_8 = arith.constant dense<0.000000e+00> : vector<8x20xf32>
    %10 = tpu.matmul %8, %9, %cst_8 {dimension_numbers = #tpu.dot_dimension_numbers<[1], [0], [0], [1], [0, 0, 1, 1], [], []>} : vector<8x200xf32>, vector<200x20xf32>, vector<8x20xf32> -> vector<8x20xf32>
    %c304 = arith.constant 304 : index
    %c0_9 = arith.constant 0 : index
    %11 = vector.load %arg5[%c304, %c0_9] : memref<312x20xf32, #tpu.memory_space<vmem>>, vector<1x20xf32>
    %12 = vector.broadcast %11 : vector<1x20xf32> to vector<8x20xf32>
    %13 = arith.addf %10, %12 : vector<8x20xf32>
    %cst_10 = arith.constant 0.000000e+00 : f32
    %14 = vector.broadcast %cst_10 : f32 to vector<8x20xf32>
    %15 = arith.maximumf %13, %14 : vector<8x20xf32>
    %16 = tpu.concatenate %7, %15 in 0 : vector<8x20xf32>, vector<8x20xf32> -> vector<16x20xf32>
    %c256 = arith.constant 256 : index
    %c0_11 = arith.constant 0 : index
    %17 = vector.load %arg5[%c256, %c0_11] : memref<312x20xf32, #tpu.memory_space<vmem>>, vector<20x20xf32>
    %cst_12 = arith.constant dense<0.000000e+00> : vector<16x20xf32>
    %18 = tpu.matmul %16, %17, %cst_12 {dimension_numbers = #tpu.dot_dimension_numbers<[1], [0], [0], [1], [0, 0, 1, 1], [], []>} : vector<16x20xf32>, vector<20x20xf32>, vector<16x20xf32> -> vector<16x20xf32>
    %c306 = arith.constant 306 : index
    %c0_13 = arith.constant 0 : index
    %19 = vector.load %arg5[%c306, %c0_13] : memref<312x20xf32, #tpu.memory_space<vmem>>, vector<1x20xf32>
    %20 = vector.broadcast %19 : vector<1x20xf32> to vector<16x20xf32>
    %21 = arith.addf %18, %20 : vector<16x20xf32>
    %cst_14 = arith.constant 0.000000e+00 : f32
    %22 = vector.broadcast %cst_14 : f32 to vector<16x20xf32>
    %23 = arith.maximumf %21, %22 : vector<16x20xf32>
    %c280 = arith.constant 280 : index
    %c0_15 = arith.constant 0 : index
    %24 = vector.load %arg5[%c280, %c0_15] : memref<312x20xf32, #tpu.memory_space<vmem>>, vector<20x20xf32>
    %cst_16 = arith.constant dense<0.000000e+00> : vector<16x20xf32>
    %25 = tpu.matmul %23, %24, %cst_16 {dimension_numbers = #tpu.dot_dimension_numbers<[1], [0], [0], [1], [0, 0, 1, 1], [], []>} : vector<16x20xf32>, vector<20x20xf32>, vector<16x20xf32> -> vector<16x20xf32>
    %c307 = arith.constant 307 : index
    %c0_17 = arith.constant 0 : index
    %26 = vector.load %arg5[%c307, %c0_17] : memref<312x20xf32, #tpu.memory_space<vmem>>, vector<1x20xf32>
    %27 = vector.broadcast %26 : vector<1x20xf32> to vector<16x20xf32>
    %28 = arith.addf %25, %27 : vector<16x20xf32>
    %cst_18 = arith.constant 0.000000e+00 : f32
    %29 = vector.broadcast %cst_18 : f32 to vector<16x20xf32>
    %30 = arith.maximumf %28, %29 : vector<16x20xf32>
    %c0_19 = arith.constant 0 : index
    %c0_20 = arith.constant 0 : index
    %31 = vector.load %arg6[%c0_19, %c0_20] : memref<32x128xf32, #tpu.memory_space<vmem>>, vector<20x128xf32>
    %cst_21 = arith.constant dense<0.000000e+00> : vector<16x128xf32>
    %32 = tpu.matmul %30, %31, %cst_21 {dimension_numbers = #tpu.dot_dimension_numbers<[1], [0], [0], [1], [0, 0, 1, 1], [], []>} : vector<16x20xf32>, vector<20x128xf32>, vector<16x128xf32> -> vector<16x128xf32>
    %c24 = arith.constant 24 : index
    %c0_22 = arith.constant 0 : index
    %33 = vector.load %arg6[%c24, %c0_22] : memref<32x128xf32, #tpu.memory_space<vmem>>, vector<1x128xf32>
    %34 = vector.broadcast %33 : vector<1x128xf32> to vector<16x128xf32>
    %35 = arith.addf %32, %34 : vector<16x128xf32>
    %36 = vector.extract_strided_slice %35 {offsets = [0, 0], sizes = [16, 10], strides = [1, 1]} : vector<16x128xf32> to vector<16x10xf32>
    %37 = vector.extract_strided_slice %35 {offsets = [0, 10], sizes = [16, 10], strides = [1, 1]} : vector<16x128xf32> to vector<16x10xf32>
    %c0_23 = arith.constant 0 : index
    %c0_24 = arith.constant 0 : index
    %38 = vector.load %arg4[%c0_23, %c0_24] : memref<8x10xf32, #tpu.memory_space<vmem>>, vector<8x10xf32>
    %c0_25 = arith.constant 0 : index
    %c0_26 = arith.constant 0 : index
    %39 = vector.load %arg3[%c0_25, %c0_26] : memref<8x10xf32, #tpu.memory_space<vmem>>, vector<8x10xf32>
    %40 = tpu.concatenate %38, %39 in 0 : vector<8x10xf32>, vector<8x10xf32> -> vector<16x10xf32>
    %cst_27 = arith.constant 5.000000e-01 : f32
    %41 = vector.broadcast %cst_27 : f32 to vector<16x10xf32>
    %42 = arith.mulf %41, %37 : vector<16x10xf32>
    %43 = math.exp %42 : vector<16x10xf32>
    %44 = arith.mulf %40, %43 : vector<16x10xf32>
    %45 = arith.addf %44, %36 : vector<16x10xf32>
    %c0_28 = arith.constant 0 : index
    %c0_29 = arith.constant 0 : index
    %46 = vector.load %arg7[%c0_28, %c0_29] : memref<40x10xf32, #tpu.memory_space<vmem>>, vector<10x10xf32>
    %cst_30 = arith.constant dense<0.000000e+00> : vector<16x10xf32>
    %47 = tpu.matmul %45, %46, %cst_30 {dimension_numbers = #tpu.dot_dimension_numbers<[1], [0], [0], [1], [0, 0, 1, 1], [], []>} : vector<16x10xf32>, vector<10x10xf32>, vector<16x10xf32> -> vector<16x10xf32>
    %c32 = arith.constant 32 : index
    %c0_31 = arith.constant 0 : index
    %48 = vector.load %arg7[%c32, %c0_31] : memref<40x10xf32, #tpu.memory_space<vmem>>, vector<1x10xf32>
    %49 = vector.broadcast %48 : vector<1x10xf32> to vector<16x10xf32>
    %50 = arith.addf %47, %49 : vector<16x10xf32>
    %cst_32 = arith.constant 0.000000e+00 : f32
    %51 = vector.broadcast %cst_32 : f32 to vector<16x10xf32>
    %52 = arith.maximumf %50, %51 : vector<16x10xf32>
    %c16 = arith.constant 16 : index
    %c0_33 = arith.constant 0 : index
    %53 = vector.load %arg7[%c16, %c0_33] : memref<40x10xf32, #tpu.memory_space<vmem>>, vector<10x10xf32>
    %cst_34 = arith.constant dense<0.000000e+00> : vector<16x10xf32>
    %54 = tpu.matmul %52, %53, %cst_34 {dimension_numbers = #tpu.dot_dimension_numbers<[1], [0], [0], [1], [0, 0, 1, 1], [], []>} : vector<16x10xf32>, vector<10x10xf32>, vector<16x10xf32> -> vector<16x10xf32>
    %c33 = arith.constant 33 : index
    %c0_35 = arith.constant 0 : index
    %55 = vector.load %arg7[%c33, %c0_35] : memref<40x10xf32, #tpu.memory_space<vmem>>, vector<1x10xf32>
    %56 = vector.broadcast %55 : vector<1x10xf32> to vector<16x10xf32>
    %57 = arith.addf %54, %56 : vector<16x10xf32>
    %cst_36 = arith.constant 0.000000e+00 : f32
    %58 = vector.broadcast %cst_36 : f32 to vector<16x10xf32>
    %59 = arith.maximumf %57, %58 : vector<16x10xf32>
    %60 = vector.extract_strided_slice %59 {offsets = [0, 0], sizes = [8, 10], strides = [1, 1]} : vector<16x10xf32> to vector<8x10xf32>
    %c0_37 = arith.constant 0 : index
    %c0_38 = arith.constant 0 : index
    %61 = vector.load %arg8[%c0_37, %c0_38] : memref<24x128xf32, #tpu.memory_space<vmem>>, vector<10x128xf32>
    %cst_39 = arith.constant dense<0.000000e+00> : vector<8x128xf32>
    %62 = tpu.matmul %60, %61, %cst_39 {dimension_numbers = #tpu.dot_dimension_numbers<[1], [0], [0], [1], [0, 0, 1, 1], [], []>} : vector<8x10xf32>, vector<10x128xf32>, vector<8x128xf32> -> vector<8x128xf32>
    %c16_40 = arith.constant 16 : index
    %c0_41 = arith.constant 0 : index
    %63 = vector.load %arg8[%c16_40, %c0_41] : memref<24x128xf32, #tpu.memory_space<vmem>>, vector<1x128xf32>
    %64 = vector.broadcast %63 : vector<1x128xf32> to vector<8x128xf32>
    %65 = arith.addf %62, %64 : vector<8x128xf32>
    %66 = vector.extract_strided_slice %59 {offsets = [8, 0], sizes = [8, 10], strides = [1, 1]} : vector<16x10xf32> to vector<8x10xf32>
    %c0_42 = arith.constant 0 : index
    %c0_43 = arith.constant 0 : index
    %67 = vector.load %arg9[%c0_42, %c0_43] : memref<24x512xf32, #tpu.memory_space<vmem>>, vector<10x512xf32>
    %cst_44 = arith.constant dense<0.000000e+00> : vector<8x512xf32>
    %68 = tpu.matmul %66, %67, %cst_44 {dimension_numbers = #tpu.dot_dimension_numbers<[1], [0], [0], [1], [0, 0, 1, 1], [], []>} : vector<8x10xf32>, vector<10x512xf32>, vector<8x512xf32> -> vector<8x512xf32>
    %c16_45 = arith.constant 16 : index
    %c0_46 = arith.constant 0 : index
    %69 = vector.load %arg9[%c16_45, %c0_46] : memref<24x512xf32, #tpu.memory_space<vmem>>, vector<1x512xf32>
    %70 = vector.broadcast %69 : vector<1x512xf32> to vector<8x512xf32>
    %71 = arith.addf %68, %70 : vector<8x512xf32>
    %c0_47 = arith.constant 0 : index
    %c0_48 = arith.constant 0 : index
    %72 = vector.load %arg10[%c0_47, %c0_48] : memref<8x896xf32, #tpu.memory_space<vmem>>, vector<8x128xf32>
    tpu.vector_store %arg10[%c0_47, %c0_48], %65 {strides = array<i32>} : memref<8x896xf32, #tpu.memory_space<vmem>>, vector<8x128xf32>,
    %73 = vector.extract_strided_slice %35 {offsets = [0, 0], sizes = [8, 128], strides = [1, 1]} : vector<16x128xf32> to vector<8x128xf32>
    %c0_49 = arith.constant 0 : index
    %c128 = arith.constant 128 : index
    %74 = vector.load %arg10[%c0_49, %c128] : memref<8x896xf32, #tpu.memory_space<vmem>>, vector<8x128xf32>
    tpu.vector_store %arg10[%c0_49, %c128], %73 {strides = array<i32>} : memref<8x896xf32, #tpu.memory_space<vmem>>, vector<8x128xf32>,
    %c0_50 = arith.constant 0 : index
    %c256_51 = arith.constant 256 : index
    %75 = vector.load %arg10[%c0_50, %c256_51] : memref<8x896xf32, #tpu.memory_space<vmem>>, vector<8x512xf32>
    tpu.vector_store %arg10[%c0_50, %c256_51], %71 {strides = array<i32>} : memref<8x896xf32, #tpu.memory_space<vmem>>, vector<8x512xf32>,
    %76 = vector.extract_strided_slice %35 {offsets = [8, 0], sizes = [8, 128], strides = [1, 1]} : vector<16x128xf32> to vector<8x128xf32>
    %c0_52 = arith.constant 0 : index
    %c768 = arith.constant 768 : index
    %77 = vector.load %arg10[%c0_52, %c768] : memref<8x896xf32, #tpu.memory_space<vmem>>, vector<8x128xf32>
    tpu.vector_store %arg10[%c0_52, %c768], %76 {strides = array<i32>} : memref<8x896xf32, #tpu.memory_space<vmem>>, vector<8x128xf32>,
    return
  }
  func.func @transform_0(%arg0: i32) -> (i32, i32) {
    %c0_i32 = arith.constant 0 : i32
    %c0_i32_0 = arith.constant 0 : i32
    return %arg0, %c0_i32 : i32, i32
  }
  func.func @transform_1(%arg0: i32) -> (i32, i32) {
    %c0_i32 = arith.constant 0 : i32
    %c0_i32_0 = arith.constant 0 : i32
    return %arg0, %c0_i32 : i32, i32
  }
  func.func @transform_2(%arg0: i32) -> (i32, i32) {
    %c0_i32 = arith.constant 0 : i32
    %c0_i32_0 = arith.constant 0 : i32
    return %arg0, %c0_i32 : i32, i32
  }
  func.func @transform_3(%arg0: i32) -> (i32, i32) {
    %c0_i32 = arith.constant 0 : i32
    %c0_i32_0 = arith.constant 0 : i32
    return %arg0, %c0_i32 : i32, i32
  }
  func.func @transform_4(%arg0: i32) -> (i32, i32) {
    %c0_i32 = arith.constant 0 : i32
    %c0_i32_0 = arith.constant 0 : i32
    %c0_i32_1 = arith.constant 0 : i32
    return %c0_i32, %c0_i32_0 : i32, i32
  }
  func.func @transform_5(%arg0: i32) -> (i32, i32) {
    %c0_i32 = arith.constant 0 : i32
    %c0_i32_0 = arith.constant 0 : i32
    %c0_i32_1 = arith.constant 0 : i32
    return %c0_i32, %c0_i32_0 : i32, i32
  }
  func.func @transform_6(%arg0: i32) -> (i32, i32) {
    %c0_i32 = arith.constant 0 : i32
    %c0_i32_0 = arith.constant 0 : i32
    %c0_i32_1 = arith.constant 0 : i32
    return %c0_i32, %c0_i32_0 : i32, i32
  }
  func.func @transform_7(%arg0: i32) -> (i32, i32) {
    %c0_i32 = arith.constant 0 : i32
    %c0_i32_0 = arith.constant 0 : i32
    %c0_i32_1 = arith.constant 0 : i32
    return %c0_i32, %c0_i32_0 : i32, i32
  }
  func.func @transform_8(%arg0: i32) -> (i32, i32) {
    %c0_i32 = arith.constant 0 : i32
    %c0_i32_0 = arith.constant 0 : i32
    %c0_i32_1 = arith.constant 0 : i32
    return %c0_i32, %c0_i32_0 : i32, i32
  }
  func.func @transform_9(%arg0: i32) -> (i32, i32) {
    %c0_i32 = arith.constant 0 : i32
    %c0_i32_0 = arith.constant 0 : i32
    return %arg0, %c0_i32 : i32, i32
  }
}

</mosaic_0001>

<llo_original>
// kernel: tpu_custom_call.1
$region0: #{tpu_custom_call.1}
  #allocation0 [shape = 'u32[]', space=smem, size = 0x4, offset = 0x4, fixed_abs, tag = 'smem constant byte address 0x4 - core index']
  #allocation1 [shape = 'u32[72,128]{1,0:T(1,128)}', space=vmem, size = 0x9000, scoped, tag = 'internal scratch']
  %s0 = inlined_call_operand.vmem [shape: f32[8,200], index: 0, kind: input, shape index: {}]
  %s1 = inlined_call_operand.vmem [shape: f32[8,50], index: 1, kind: input, shape index: {}]
  %s2 = inlined_call_operand.vmem [shape: f32[8,10], index: 2, kind: input, shape index: {}]
  %s3 = inlined_call_operand.vmem [shape: f32[8,10], index: 3, kind: input, shape index: {}]
  %s4 = inlined_call_operand.vmem [shape: f32[312,20], index: 4, kind: input, shape index: {}]
  %s5 = inlined_call_operand.vmem [shape: f32[32,128], index: 5, kind: input, shape index: {}]
  %s6 = inlined_call_operand.vmem [shape: f32[40,10], index: 6, kind: input, shape index: {}]
  %s7 = inlined_call_operand.vmem [shape: f32[24,128], index: 7, kind: input, shape index: {}]
  %s8 = inlined_call_operand.vmem [shape: f32[24,512], index: 8, kind: input, shape index: {}]
  %s9 = inlined_call_operand.hbm [shape: f32[8,896], index: 9, kind: output, shape index: {}]
  %s10 = sld [smem:[#allocation0]]
  $region46: #{tpu_custom_call.1} parent=0
    _
  %s12 = ssub.s32 1, %s10
  %s13 = scalar_select 0, %s12, %s10
  $region1: #{tpu_custom_call.1} parent=0
    #allocation2 [shape = 'u8[28672]{0}', space=vmem, size = 0x7000, scoped, tag = 'output window, operand 0, single buffered']
    #allocation3 [shape = 's32[1]{0}', space=sflag, size = 0x4, scoped, tag = 'scoped memory for tpu_custom_call.1']
    %14 = vsyncpa [#allocation3], 0
    // Predicated region
    $region2: #{tpu_custom_call.1} parent=1 // pred_check
      _
    $region3: #{tpu_custom_call.1} parent=1 // pred_check_branch
      %16 = sbr.rel (0) target = $region5
    $region4: #{tpu_custom_call.1} parent=1 // pred_region
      _
    $region5: #{tpu_custom_call.1} parent=1 // pred_fallthru
      _
    // Predicated region
    $region6: #{tpu_custom_call.1} parent=1 // pred_check
      _
    $region7: #{tpu_custom_call.1} parent=1 // pred_check_branch
      %18 = sbr.rel (0) target = $region9
    $region8: #{tpu_custom_call.1} parent=1 // pred_region
      _
    $region9: #{tpu_custom_call.1} parent=1 // pred_fallthru
      _
    // Predicated region
    $region10: #{tpu_custom_call.1} parent=1 // pred_check
      _
    $region11: #{tpu_custom_call.1} parent=1 // pred_check_branch
      %20 = sbr.rel (0) target = $region13
    $region12: #{tpu_custom_call.1} parent=1 // pred_region
      _
    $region13: #{tpu_custom_call.1} parent=1 // pred_fallthru
      _
    // Predicated region
    $region14: #{tpu_custom_call.1} parent=1 // pred_check
      _
    $region15: #{tpu_custom_call.1} parent=1 // pred_check_branch
      %22 = sbr.rel (0) target = $region17
    $region16: #{tpu_custom_call.1} parent=1 // pred_region
      _
    $region17: #{tpu_custom_call.1} parent=1 // pred_fallthru
      _
    // Predicated region
    $region18: #{tpu_custom_call.1} parent=1 // pred_check
      _
    $region19: #{tpu_custom_call.1} parent=1 // pred_check_branch
      %24 = sbr.rel (0) target = $region21
    $region20: #{tpu_custom_call.1} parent=1 // pred_region
      _
    $region21: #{tpu_custom_call.1} parent=1 // pred_fallthru
      _
    // Predicated region
    $region22: #{tpu_custom_call.1} parent=1 // pred_check
      _
    $region23: #{tpu_custom_call.1} parent=1 // pred_check_branch
      %26 = sbr.rel (0) target = $region25
    $region24: #{tpu_custom_call.1} parent=1 // pred_region
      _
    $region25: #{tpu_custom_call.1} parent=1 // pred_fallthru
      _
    // Predicated region
    $region26: #{tpu_custom_call.1} parent=1 // pred_check
      _
    $region27: #{tpu_custom_call.1} parent=1 // pred_check_branch
      %28 = sbr.rel (0) target = $region29
    $region28: #{tpu_custom_call.1} parent=1 // pred_region
      _
    $region29: #{tpu_custom_call.1} parent=1 // pred_fallthru
      _
    // Predicated region
    $region30: #{tpu_custom_call.1} parent=1 // pred_check
      _
    $region31: #{tpu_custom_call.1} parent=1 // pred_check_branch
      %30 = sbr.rel (0) target = $region33
    $region32: #{tpu_custom_call.1} parent=1 // pred_region
      _
    $region33: #{tpu_custom_call.1} parent=1 // pred_fallthru
      _
    // Predicated region
    $region34: #{tpu_custom_call.1} parent=1 // pred_check
      _
    $region35: #{tpu_custom_call.1} parent=1 // pred_check_branch
      %32 = sbr.rel (0) target = $region37
    $region36: #{tpu_custom_call.1} parent=1 // pred_region
      _
    $region37: #{tpu_custom_call.1} parent=1 // pred_fallthru
      _
    %v33 = vld [vmem:[%s1] sm:$0xff]
    %v34 = vld [vmem:[%s4 + $0xc8] sm:$0xff]
    %v35 = vld [vmem:[%s4 + $0xd0] sm:$0xff]
    %v36 = vld [vmem:[%s4 + $0xd8] sm:$0xff]
    %v37 = vld [vmem:[%s4 + $0xe0] sm:$0xff]
    %v38 = vld [vmem:[%s4 + $0xe8] sm:$0xff]
    %v39 = vld [vmem:[%s4 + $0xf0] sm:$0xff]
    %v40 = vld [vmem:[%s4 + $0xf8] sm:$0x3]
    %v41 = vld [vmem:[%s4 + $0x131] sm:$0x1]
    %v42 = vperm.slane %v41, 0
    %vm43 = vcmask 408576
    %v45 = vsel %vm43, %v33, 0
    %vm47 = vcmask 1041408
    %v49 = vsel %vm47, %v40, 0
    %51 = vmatpush.msra.mxu0 0.0
    %52 = vmatpush.msra.mxu0 0.0
    %53 = vmatpush.msra.mxu0 0.0
    %54 = vmatpush.msra.mxu0 0.0
    %55 = vmatpush.msra.mxu0 0.0
    %56 = vmatpush.msra.mxu0 0.0
    %57 = vmatpush.msra.mxu0 0.0
    %58 = vmatpush.msra.mxu0 0.0
    %59 = vmatpush.msra.mxu0 0.0
    %60 = vmatpush.msra.mxu0 %v49
    %61 = vmatpush.msra.mxu0 %v39
    %62 = vmatpush.msra.mxu0 %v38
    %63 = vmatpush.msra.mxu0 %v37
    %64 = vmatpush.msra.mxu0 %v36
    %65 = vmatpush.msra.mxu0 %v35
    %66 = vmatpush.msra.mxu0 %v34
    %67 = vmatmul.f32.gmra.mxu0 %v45
    %v68 = vpop.f32.mrf.mxu0
    %v69 = vadd.f32 %v42, %v68
    %70 = vdwg.mxu0
    %v71 = vmax.f32 %v69, 0.0
    %v72 = vld [vmem:[%s0] sm:$0xff]
    %v73 = vld [vmem:[%s0 + $0x8] sm:$0xff]
    %v74 = vld [vmem:[%s4] sm:$0xff]
    %v75 = vld [vmem:[%s4 + $0x8] sm:$0xff]
    %v76 = vld [vmem:[%s4 + $0x10] sm:$0xff]
    %v77 = vld [vmem:[%s4 + $0x18] sm:$0xff]
    %v78 = vld [vmem:[%s4 + $0x20] sm:$0xff]
    %v79 = vld [vmem:[%s4 + $0x28] sm:$0xff]
    %v80 = vld [vmem:[%s4 + $0x30] sm:$0xff]
    %v81 = vld [vmem:[%s4 + $0x38] sm:$0xff]
    %v82 = vld [vmem:[%s4 + $0x40] sm:$0xff]
    %v83 = vld [vmem:[%s4 + $0x48] sm:$0xff]
    %v84 = vld [vmem:[%s4 + $0x50] sm:$0xff]
    %v85 = vld [vmem:[%s4 + $0x58] sm:$0xff]
    %v86 = vld [vmem:[%s4 + $0x60] sm:$0xff]
    %v87 = vld [vmem:[%s4 + $0x68] sm:$0xff]
    %v88 = vld [vmem:[%s4 + $0x70] sm:$0xff]
    %v89 = vld [vmem:[%s4 + $0x78] sm:$0xff]
    %v90 = vld [vmem:[%s4 + $0x80] sm:$0xff]
    %v91 = vld [vmem:[%s4 + $0x88] sm:$0xff]
    %v92 = vld [vmem:[%s4 + $0x90] sm:$0xff]
    %v93 = vld [vmem:[%s4 + $0x98] sm:$0xff]
    %v94 = vld [vmem:[%s4 + $0xa0] sm:$0xff]
    %v95 = vld [vmem:[%s4 + $0xa8] sm:$0xff]
    %v96 = vld [vmem:[%s4 + $0xb0] sm:$0xff]
    %v97 = vld [vmem:[%s4 + $0xb8] sm:$0xff]
    %v98 = vld [vmem:[%s4 + $0xc0] sm:$0xff]
    %v99 = vld [vmem:[%s4 + $0x130] sm:$0x1]
    %v100 = vperm.slane %v99, 0
    %vm101 = vcmask 588800
    %v103 = vsel %vm101, %v73, 0
    %105 = vmatpush.msra.mxu0 %v89
    %106 = vmatpush.msra.mxu0 %v88
    %107 = vmatpush.msra.mxu0 %v87
    %108 = vmatpush.msra.mxu0 %v86
    %109 = vmatpush.msra.mxu0 %v85
    %110 = vmatpush.msra.mxu0 %v84
    %111 = vmatpush.msra.mxu0 %v83
    %112 = vmatpush.msra.mxu0 %v82
    %113 = vmatpush.msra.mxu0 %v81
    %114 = vmatpush.msra.mxu0 %v80
    %115 = vmatpush.msra.mxu0 %v79
    %116 = vmatpush.msra.mxu0 %v78
    %117 = vmatpush.msra.mxu0 %v77
    %118 = vmatpush.msra.mxu0 %v76
    %119 = vmatpush.msra.mxu0 %v75
    %120 = vmatpush.msra.mxu0 %v74
    %121 = vmatmul.f32.gmra.mxu0 %v72
    %v122 = vpop.f32.mrf.mxu0
    %v123 = vadd.f32 %v100, %v122
    %124 = vdwg.mxu0
    %125 = vmatpush.msra.mxu0 0.0
    %126 = vmatpush.msra.mxu0 0.0
    %127 = vmatpush.msra.mxu0 0.0
    %128 = vmatpush.msra.mxu0 0.0
    %129 = vmatpush.msra.mxu0 0.0
    %130 = vmatpush.msra.mxu0 0.0
    %131 = vmatpush.msra.mxu0 0.0
    %132 = vmatpush.msra.mxu0 %v98
    %133 = vmatpush.msra.mxu0 %v97
    %134 = vmatpush.msra.mxu0 %v96
    %135 = vmatpush.msra.mxu0 %v95
    %136 = vmatpush.msra.mxu0 %v94
    %137 = vmatpush.msra.mxu0 %v93
    %138 = vmatpush.msra.mxu0 %v92
    %139 = vmatpush.msra.mxu0 %v91
    %140 = vmatpush.msra.mxu0 %v90
    %141 = vmatmul.f32.gmra.mxu0 %v103
    %v142 = vpop.f32.mrf.mxu0
    %v143 = vadd.f32 %v123, %v142
    %144 = vdwg.mxu0
    %v145 = vmax.f32 %v143, 0.0
    %v146 = vld [vmem:[%s4 + $0x100] sm:$0xff]
    %v147 = vld [vmem:[%s4 + $0x108] sm:$0xff]
    %v148 = vld [vmem:[%s4 + $0x110] sm:$0xf]
    %v149 = vld [vmem:[%s4 + $0x132] sm:$0x1]
    %v150 = vperm.slane %v149, 0
    %vm151 = vcmask 162816
    %v153 = vsel %vm151, %v71, 0
    %v156 = vsel %vm151, %v145, 0
    %vm158 = vcmask 1043456
    %v160 = vsel %vm158, %v148, 0
    %162 = vmatpush.msra.mxu0 0.0
    %163 = vmatpush.msra.mxu0 0.0
    %164 = vmatpush.msra.mxu0 0.0
    %165 = vmatpush.msra.mxu0 0.0
    %166 = vmatpush.msra.mxu0 0.0
    %167 = vmatpush.msra.mxu0 0.0
    %168 = vmatpush.msra.mxu0 0.0
    %169 = vmatpush.msra.mxu0 0.0
    %170 = vmatpush.msra.mxu0 0.0
    %171 = vmatpush.msra.mxu0 0.0
    %172 = vmatpush.msra.mxu0 0.0
    %173 = vmatpush.msra.mxu0 0.0
    %174 = vmatpush.msra.mxu0 0.0
    %175 = vmatpush.msra.mxu0 %v160
    %176 = vmatpush.msra.mxu0 %v147
    %177 = vmatpush.msra.mxu0 %v146
    %178 = vmatmul.f32.gmra.mxu0 %v153
    %v179 = vpop.f32.mrf.mxu0
    %v180 = vadd.f32 %v150, %v179
    %181 = vmatmul.f32.gmra.mxu0 %v156
    %v182 = vpop.f32.mrf.mxu0
    %v183 = vadd.f32 %v150, %v182
    %184 = vdwg.mxu0
    %v185 = vmax.f32 %v180, 0.0
    %v186 = vmax.f32 %v183, 0.0
    %v187 = vld [vmem:[%s4 + $0x118] sm:$0xff]
    %v188 = vld [vmem:[%s4 + $0x120] sm:$0xff]
    %v189 = vld [vmem:[%s4 + $0x128] sm:$0xf]
    %v190 = vld [vmem:[%s4 + $0x133] sm:$0x1]
    %v191 = vperm.slane %v190, 0
    %v193 = vsel %vm151, %v185, 0
    %v196 = vsel %vm151, %v186, 0
    %v199 = vsel %vm158, %v189, 0
    %201 = vmatpush.msra.mxu0 0.0
    %202 = vmatpush.msra.mxu0 0.0
    %203 = vmatpush.msra.mxu0 0.0
    %204 = vmatpush.msra.mxu0 0.0
    %205 = vmatpush.msra.mxu0 0.0
    %206 = vmatpush.msra.mxu0 0.0
    %207 = vmatpush.msra.mxu0 0.0
    %208 = vmatpush.msra.mxu0 0.0
    %209 = vmatpush.msra.mxu0 0.0
    %210 = vmatpush.msra.mxu0 0.0
    %211 = vmatpush.msra.mxu0 0.0
    %212 = vmatpush.msra.mxu0 0.0
    %213 = vmatpush.msra.mxu0 0.0
    %214 = vmatpush.msra.mxu0 %v199
    %215 = vmatpush.msra.mxu0 %v188
    %216 = vmatpush.msra.mxu0 %v187
    %217 = vmatmul.f32.gmra.mxu0 %v193
    %v218 = vpop.f32.mrf.mxu0
    %v219 = vadd.f32 %v191, %v218
    %220 = vmatmul.f32.gmra.mxu0 %v196
    %v221 = vpop.f32.mrf.mxu0
    %v222 = vadd.f32 %v191, %v221
    %223 = vdwg.mxu0
    %v224 = vmax.f32 %v219, 0.0
    %v225 = vmax.f32 %v222, 0.0
    %v226 = vld [vmem:[%s5] sm:$0xff]
    %v227 = vld [vmem:[%s5 + $0x8] sm:$0xff]
    %v228 = vld [vmem:[%s5 + $0x10] sm:$0xf]
    %v229 = vld [vmem:[%s5 + $0x18] sm:$0x1]
    %v230 = vperm.slane %v229, 0
    %v232 = vsel %vm151, %v224, 0
    %v235 = vsel %vm151, %v225, 0
    %v238 = vsel %vm158, %v228, 0
    %240 = vmatpush.msra.mxu0 0.0
    %241 = vmatpush.msra.mxu0 0.0
    %242 = vmatpush.msra.mxu0 0.0
    %243 = vmatpush.msra.mxu0 0.0
    %244 = vmatpush.msra.mxu0 0.0
    %245 = vmatpush.msra.mxu0 0.0
    %246 = vmatpush.msra.mxu0 0.0
    %247 = vmatpush.msra.mxu0 0.0
    %248 = vmatpush.msra.mxu0 0.0
    %249 = vmatpush.msra.mxu0 0.0
    %250 = vmatpush.msra.mxu0 0.0
    %251 = vmatpush.msra.mxu0 0.0
    %252 = vmatpush.msra.mxu0 0.0
    %253 = vmatpush.msra.mxu0 %v238
    %254 = vmatpush.msra.mxu0 %v227
    %255 = vmatpush.msra.mxu0 %v226
    %256 = vmatmul.f32.gmra.mxu0 %v232
    %v257 = vpop.f32.mrf.mxu0
    %v258 = vadd.f32 %v230, %v257
    %259 = vmatmul.f32.gmra.mxu0 %v235
    %v260 = vpop.f32.mrf.mxu0
    %v261 = vadd.f32 %v230, %v260
    %262 = vdwg.mxu0
    %v263 = vld [vmem:[%s3] sm:$0xff]
    %v264 = vld [vmem:[%s2] sm:$0xff]
    %v265 = vmul.f32 %v258, 0.5
    %v266 = vmul.f32 %v261, 0.5
    %v267 = vmul.f32 %v265, 1.442695
    %v268 = vpow.pop %v267
    %v269 = vmul.f32 %v266, 1.442695
    %v270 = vpow.pop %v269
    %273 = vrot.lane.b32.xlu0 %v268, 118
    %v274 = vpop.permute.xlu0 %273
    %275 = vrot.lane.b32.xlu0 %v270, 118
    %v276 = vpop.permute.xlu0 %275
    %v279 = vmul.f32 %v263, %v274
    %v280 = vmul.f32 %v264, %v276
    %v281 = vadd.f32 %v279, %v258
    %v282 = vadd.f32 %v280, %v261
    %v283 = vld [vmem:[%s6] sm:$0xff]
    %v284 = vld [vmem:[%s6 + $0x8] sm:$0x3]
    %v285 = vld [vmem:[%s6 + $0x20] sm:$0x1]
    %v286 = vperm.slane %v285, 0
    %vm287 = vcmask 80896
    %v289 = vsel %vm287, %v281, 0
    %v292 = vsel %vm287, %v282, 0
    %v295 = vsel %vm47, %v284, 0
    %297 = vmatpush.msra.mxu0 0.0
    %298 = vmatpush.msra.mxu0 0.0
    %299 = vmatpush.msra.mxu0 0.0
    %300 = vmatpush.msra.mxu0 0.0
    %301 = vmatpush.msra.mxu0 0.0
    %302 = vmatpush.msra.mxu0 0.0
    %303 = vmatpush.msra.mxu0 0.0
    %304 = vmatpush.msra.mxu0 0.0
    %305 = vmatpush.msra.mxu0 0.0
    %306 = vmatpush.msra.mxu0 0.0
    %307 = vmatpush.msra.mxu0 0.0
    %308 = vmatpush.msra.mxu0 0.0
    %309 = vmatpush.msra.mxu0 0.0
    %310 = vmatpush.msra.mxu0 0.0
    %311 = vmatpush.msra.mxu0 %v295
    %312 = vmatpush.msra.mxu0 %v283
    %313 = vmatmul.f32.gmra.mxu0 %v289
    %v314 = vpop.f32.mrf.mxu0
    %v315 = vadd.f32 %v286, %v314
    %316 = vmatmul.f32.gmra.mxu0 %v292
    %v317 = vpop.f32.mrf.mxu0
    %v318 = vadd.f32 %v286, %v317
    %319 = vdwg.mxu0
    %v320 = vmax.f32 %v315, 0.0
    %v321 = vmax.f32 %v318, 0.0
    %v322 = vld [vmem:[%s6 + $0x10] sm:$0xff]
    %v323 = vld [vmem:[%s6 + $0x18] sm:$0x3]
    %v324 = vld [vmem:[%s6 + $0x21] sm:$0x1]
    %v325 = vperm.slane %v324, 0
    %v327 = vsel %vm287, %v320, 0
    %v330 = vsel %vm287, %v321, 0
    %v333 = vsel %vm47, %v323, 0
    %335 = vmatpush.msra.mxu0 0.0
    %336 = vmatpush.msra.mxu0 0.0
    %337 = vmatpush.msra.mxu0 0.0
    %338 = vmatpush.msra.mxu0 0.0
    %339 = vmatpush.msra.mxu0 0.0
    %340 = vmatpush.msra.mxu0 0.0
    %341 = vmatpush.msra.mxu0 0.0
    %342 = vmatpush.msra.mxu0 0.0
    %343 = vmatpush.msra.mxu0 0.0
    %344 = vmatpush.msra.mxu0 0.0
    %345 = vmatpush.msra.mxu0 0.0
    %346 = vmatpush.msra.mxu0 0.0
    %347 = vmatpush.msra.mxu0 0.0
    %348 = vmatpush.msra.mxu0 0.0
    %349 = vmatpush.msra.mxu0 %v333
    %350 = vmatpush.msra.mxu0 %v322
    %351 = vmatmul.f32.gmra.mxu0 %v327
    %v352 = vpop.f32.mrf.mxu0
    %v353 = vadd.f32 %v325, %v352
    %354 = vmatmul.f32.gmra.mxu0 %v330
    %v355 = vpop.f32.mrf.mxu0
    %v356 = vadd.f32 %v325, %v355
    %357 = vdwg.mxu0
    %v358 = vmax.f32 %v353, 0.0
    %v359 = vmax.f32 %v356, 0.0
    %v360 = vld [vmem:[%s7] sm:$0xff]
    %v361 = vld [vmem:[%s7 + $0x8] sm:$0x3]
    %v362 = vld [vmem:[%s7 + $0x10] sm:$0x1]
    %v363 = vperm.slane %v362, 0
    %v365 = vsel %vm287, %v358, 0
    %v368 = vsel %vm47, %v361, 0
    %370 = vmatpush.msra.mxu0 0.0
    %371 = vmatpush.msra.mxu0 0.0
    %372 = vmatpush.msra.mxu0 0.0
    %373 = vmatpush.msra.mxu0 0.0
    %374 = vmatpush.msra.mxu0 0.0
    %375 = vmatpush.msra.mxu0 0.0
    %376 = vmatpush.msra.mxu0 0.0
    %377 = vmatpush.msra.mxu0 0.0
    %378 = vmatpush.msra.mxu0 0.0
    %379 = vmatpush.msra.mxu0 0.0
    %380 = vmatpush.msra.mxu0 0.0
    %381 = vmatpush.msra.mxu0 0.0
    %382 = vmatpush.msra.mxu0 0.0
    %383 = vmatpush.msra.mxu0 0.0
    %384 = vmatpush.msra.mxu0 %v368
    %385 = vmatpush.msra.mxu0 %v360
    %386 = vmatmul.f32.gmra.mxu0 %v365
    %v387 = vpop.f32.mrf.mxu0
    %v388 = vadd.f32 %v363, %v387
    %389 = vdwg.mxu0
    %v390 = vld [vmem:[%s8] sm:$0xff]
    %v391 = vld [vmem:[%s8 + $0x8] sm:$0xff]
    %v392 = vld [vmem:[%s8 + $0x10] sm:$0xff]
    %v393 = vld [vmem:[%s8 + $0x18] sm:$0xff]
    %v394 = vld [vmem:[%s8 + $0x20] sm:$0x3]
    %v395 = vld [vmem:[%s8 + $0x28] sm:$0x3]
    %v396 = vld [vmem:[%s8 + $0x30] sm:$0x3]
    %v397 = vld [vmem:[%s8 + $0x38] sm:$0x3]
    %s398 = scalar_lea.vmem %s8, 64
    %v399 = vld [vmem:[%s398] ss:$8 sm:$0xf]
    %v401 = vperm.slane %v399, 0
    %v402 = vperm.slane %v399, 1
    %v403 = vperm.slane %v399, 2
    %v404 = vperm.slane %v399, 3
    %v410 = vsel %vm287, %v359, 0
    %v413 = vsel %vm47, %v394, 0
    %v416 = vsel %vm47, %v395, 0
    %v419 = vsel %vm47, %v396, 0
    %v422 = vsel %vm47, %v397, 0
    %424 = vmatpush.msra.mxu0 0.0
    %425 = vmatpush.msra.mxu0 0.0
    %426 = vmatpush.msra.mxu0 0.0
    %427 = vmatpush.msra.mxu0 0.0
    %428 = vmatpush.msra.mxu0 0.0
    %429 = vmatpush.msra.mxu0 0.0
    %430 = vmatpush.msra.mxu0 0.0
    %431 = vmatpush.msra.mxu0 0.0
    %432 = vmatpush.msra.mxu0 0.0
    %433 = vmatpush.msra.mxu0 0.0
    %434 = vmatpush.msra.mxu0 0.0
    %435 = vmatpush.msra.mxu0 0.0
    %436 = vmatpush.msra.mxu0 0.0
    %437 = vmatpush.msra.mxu0 0.0
    %438 = vmatpush.msra.mxu0 %v413
    %439 = vmatpush.msra.mxu0 %v390
    %440 = vmatmul.f32.gmra.mxu0 %v410
    %v441 = vpop.f32.mrf.mxu0
    %v442 = vadd.f32 %v401, %v441
    %443 = vdwg.mxu0
    %444 = vmatpush.msra.mxu0 0.0
    %445 = vmatpush.msra.mxu0 0.0
    %446 = vmatpush.msra.mxu0 0.0
    %447 = vmatpush.msra.mxu0 0.0
    %448 = vmatpush.msra.mxu0 0.0
    %449 = vmatpush.msra.mxu0 0.0
    %450 = vmatpush.msra.mxu0 0.0
    %451 = vmatpush.msra.mxu0 0.0
    %452 = vmatpush.msra.mxu0 0.0
    %453 = vmatpush.msra.mxu0 0.0
    %454 = vmatpush.msra.mxu0 0.0
    %455 = vmatpush.msra.mxu0 0.0
    %456 = vmatpush.msra.mxu0 0.0
    %457 = vmatpush.msra.mxu0 0.0
    %458 = vmatpush.msra.mxu0 %v416
    %459 = vmatpush.msra.mxu0 %v391
    %460 = vmatmul.f32.gmra.mxu0 %v410
    %v461 = vpop.f32.mrf.mxu0
    %v462 = vadd.f32 %v402, %v461
    %463 = vdwg.mxu0
    %464 = vmatpush.msra.mxu0 0.0
    %465 = vmatpush.msra.mxu0 0.0
    %466 = vmatpush.msra.mxu0 0.0
    %467 = vmatpush.msra.mxu0 0.0
    %468 = vmatpush.msra.mxu0 0.0
    %469 = vmatpush.msra.mxu0 0.0
    %470 = vmatpush.msra.mxu0 0.0
    %471 = vmatpush.msra.mxu0 0.0
    %472 = vmatpush.msra.mxu0 0.0
    %473 = vmatpush.msra.mxu0 0.0
    %474 = vmatpush.msra.mxu0 0.0
    %475 = vmatpush.msra.mxu0 0.0
    %476 = vmatpush.msra.mxu0 0.0
    %477 = vmatpush.msra.mxu0 0.0
    %478 = vmatpush.msra.mxu0 %v419
    %479 = vmatpush.msra.mxu0 %v392
    %480 = vmatmul.f32.gmra.mxu0 %v410
    %v481 = vpop.f32.mrf.mxu0
    %v482 = vadd.f32 %v403, %v481
    %483 = vdwg.mxu0
    %484 = vmatpush.msra.mxu0 0.0
    %485 = vmatpush.msra.mxu0 0.0
    %486 = vmatpush.msra.mxu0 0.0
    %487 = vmatpush.msra.mxu0 0.0
    %488 = vmatpush.msra.mxu0 0.0
    %489 = vmatpush.msra.mxu0 0.0
    %490 = vmatpush.msra.mxu0 0.0
    %491 = vmatpush.msra.mxu0 0.0
    %492 = vmatpush.msra.mxu0 0.0
    %493 = vmatpush.msra.mxu0 0.0
    %494 = vmatpush.msra.mxu0 0.0
    %495 = vmatpush.msra.mxu0 0.0
    %496 = vmatpush.msra.mxu0 0.0
    %497 = vmatpush.msra.mxu0 0.0
    %498 = vmatpush.msra.mxu0 %v422
    %499 = vmatpush.msra.mxu0 %v393
    %500 = vmatmul.f32.gmra.mxu0 %v410
    %v501 = vpop.f32.mrf.mxu0
    %v502 = vadd.f32 %v404, %v501
    %503 = vdwg.mxu0
    %504 = vst [vmem:[#allocation2] sm:$0xff] %v388
    %505 = vst [vmem:[#allocation2 + $0x8] sm:$0xff] %v258
    %506 = vst [vmem:[#allocation2 + $0x10] sm:$0xff] %v442
    %507 = vst [vmem:[#allocation2 + $0x18] sm:$0xff] %v462
    %508 = vst [vmem:[#allocation2 + $0x20] sm:$0xff] %v482
    %509 = vst [vmem:[#allocation2 + $0x28] sm:$0xff] %v502
    %510 = vst [vmem:[#allocation2 + $0x30] sm:$0xff] %v261
    // Predicated region
    $region38: #{tpu_custom_call.1} parent=1 // pred_check
      _
    $region39: #{tpu_custom_call.1} parent=1 // pred_check_branch
      %512 = sbr.rel (0) target = $region41
    $region40: #{tpu_custom_call.1} parent=1 // pred_region
      %514 = vsyncadd [#allocation3], 0
      %s516 = sshll.u32 [#allocation2], 4
      %s517 = int_to_ptr.vmem [resolvable:$true] %s516
      %s518 = sshll.u32 %s9, 4
      %s519 = int_to_ptr.hbm [resolvable:$true] %s518
      %521 = dma.vmem_to_hbm [thread:$0]  %s517, 896, %s519, [#allocation3]
    $region41: #{tpu_custom_call.1} parent=1 // pred_fallthru
      _
    // Predicated region
    $region42: #{tpu_custom_call.1} parent=1 // pred_check
      _
    $region43: #{tpu_custom_call.1} parent=1 // pred_check_branch
      %523 = sbr.rel (0) target = $region45
    $region44: #{tpu_custom_call.1} parent=1 // pred_region
      %525 = dma.done [#allocation3], 896
    $region45: #{tpu_custom_call.1} parent=1 // pred_fallthru
      _
    %526 = vsyncpa [#allocation3], 1

</llo_original>
